<compile_context>
chip_gen: v7x
topology: tpu7x:2x2x1
jax: 0.10.0
libtpu: 0.0.40
codegen_flags: <defaults>
</compile_context>

<pallas_src>
import jax
import jax.numpy as jnp
from jax.experimental import pallas as pl
from jax.experimental.pallas import tpu as pltpu


def bidaf_embed_kernel(x_ref, wp_ref, wgt1_ref, bgt1_ref, wgt2_ref, bgt2_ref,
                       out_ref):
    # TODO(synk): dropout is identity at inference; training-mode dropout
    # (pltpu.prng_random_bits mask) is not implemented here.
    D = out_ref.shape[-1]

    x = x_ref[...]                                            # (tm, E) bf16

    # projection (no bias): (tm, E) @ (E, D) -> (tm, D), f32 accumulate
    h = jnp.dot(x, wp_ref[...], preferred_element_type=jnp.float32)

    # highway layer 1: fused gate+transform matmul -> (tm, 2D)
    y = jnp.dot(h.astype(jnp.bfloat16), wgt1_ref[...],
                preferred_element_type=jnp.float32) + bgt1_ref[...]
    g = jax.nn.sigmoid(y[:, :D])
    t = jnp.maximum(y[:, D:], 0.0)
    h = h + g * (t - h)

    # highway layer 2
    y = jnp.dot(h.astype(jnp.bfloat16), wgt2_ref[...],
                preferred_element_type=jnp.float32) + bgt2_ref[...]
    g = jax.nn.sigmoid(y[:, :D])
    t = jnp.maximum(y[:, D:], 0.0)
    h = h + g * (t - h)

    out_ref[...] = h.astype(out_ref.dtype)


def bidaf_embedding(x_ids, word_vectors, w_proj,
                    wg1, bg1, wt1, bt1, wg2, bg2, wt2, bt2,
                    *, tm=None):
    """x_ids: (B, L) int32; returns (B, L, D) float32."""
    B, L = x_ids.shape
    V, E = word_vectors.shape
    D = w_proj.shape[0]
    N = B * L

    # --- row tile selection -------------------------------------------------
    if tm is None:
        if N >= 16:
            # at least 2 grid steps (v7x megacore), capped at 512 rows
            tm = min(512, ((N + 1) // 2 + 7) // 8 * 8)
        else:
            tm = (N + 7) // 8 * 8
    tm = max(8, ((tm + 7) // 8) * 8)          # (8,128) sublane constraint
    n_tiles = pl.cdiv(N, tm)
    N_pad = n_tiles * tm

    # --- embedding gather (glue), bf16 to halve the HBM round trip ----------
    ids = x_ids.reshape(-1)
    if N_pad != N:
        ids = jnp.concatenate(
            [ids, jnp.zeros((N_pad - N,), dtype=ids.dtype)])
    emb = jnp.take(word_vectors.astype(jnp.bfloat16), ids, axis=0)  # (N_pad,E)

    # --- weight prep: transpose to (in,out), fuse gate+transform, bf16 ------
    wp_t = w_proj.T.astype(jnp.bfloat16)                              # (E, D)
    wgt1 = jnp.concatenate([wg1.T, wt1.T], axis=1).astype(jnp.bfloat16)  # (D,2D)
    wgt2 = jnp.concatenate([wg2.T, wt2.T], axis=1).astype(jnp.bfloat16)  # (D,2D)
    bgt1 = jnp.concatenate([bg1, bt1]).reshape(1, 2 * D).astype(jnp.float32)
    bgt2 = jnp.concatenate([bg2, bt2]).reshape(1, 2 * D).astype(jnp.float32)

    row_spec_in = pl.BlockSpec((tm, E), lambda i: (i, 0))
    row_spec_out = pl.BlockSpec((tm, D), lambda i: (i, 0))
    w_spec = lambda r, c: pl.BlockSpec((r, c), lambda i: (0, 0))

    # advisory cost estimate (flops: proj + 2 fused highway matmuls)
    flops = int(N_pad) * (2 * E * D + 8 * D * D)
    transcendentals = 2 * int(N_pad) * D                    # sigmoids
    bytes_accessed = (int(N_pad) * E * 2 + int(N_pad) * D * 4
                      + E * D * 2 + 2 * (D * 2 * D * 2 + 2 * D * 4))

    out = pl.pallas_call(
        bidaf_embed_kernel,
        out_shape=jax.ShapeDtypeStruct((N_pad, D), jnp.float32),
        grid_spec=pltpu.PrefetchScalarGridSpec(
            num_scalar_prefetch=0,
            grid=(n_tiles,),
            in_specs=[
                row_spec_in,             # embedded rows (bf16)
                w_spec(E, D),            # W_proj^T (bf16)
                w_spec(D, 2 * D),        # [Wg1^T | Wt1^T] (bf16)
                w_spec(1, 2 * D),        # [bg1 | bt1] (f32)
                w_spec(D, 2 * D),        # [Wg2^T | Wt2^T] (bf16)
                w_spec(1, 2 * D),        # [bg2 | bt2] (f32)
            ],
            out_specs=row_spec_out,
        ),
        compiler_params=pltpu.CompilerParams(
            dimension_semantics=("parallel",)),
        cost_estimate=pl.CostEstimate(
            flops=flops,
            transcendentals=transcendentals,
            bytes_accessed=bytes_accessed),
    )(emb, wp_t, wgt1, bgt1, wgt2, bgt2)

    return out[:N].reshape(B, L, D)


def _reference(x_ids, word_vectors, w_proj, wg1, bg1, wt1, bt1, wg2, bg2, wt2, bt2):
    emb = jnp.take(word_vectors, x_ids.reshape(-1), axis=0)
    h = emb @ w_proj.T
    for (wg, bg, wt, bt) in ((wg1, bg1, wt1, bt1), (wg2, bg2, wt2, bt2)):
        g = jax.nn.sigmoid(h @ wg.T + bg)
        t = jnp.maximum(h @ wt.T + bt, 0.0)
        h = g * t + (1.0 - g) * h
    return h.reshape(*x_ids.shape, -1)


if __name__ == "__main__":
    # Small shapes consistent with the module: batch=2, seq=8,
    # vocab=50, embedding_dim=64, d_hidden=32, n_layers=2.
    B, L, V, E, D = 2, 8, 50, 64, 32

    key = jax.random.PRNGKey(0)
    keys = jax.random.split(key, 12)

    word_vectors = jax.random.normal(keys[0], (V, E), dtype=jnp.float32) * 0.1
    w_proj = jax.random.normal(keys[1], (D, E), dtype=jnp.float32) * 0.1
    wg1 = jax.random.normal(keys[2], (D, D), dtype=jnp.float32) * 0.1
    bg1 = jax.random.normal(keys[3], (D,),   dtype=jnp.float32) * 0.1
    wt1 = jax.random.normal(keys[4], (D, D), dtype=jnp.float32) * 0.1
    bt1 = jax.random.normal(keys[5], (D,),   dtype=jnp.float32) * 0.1
    wg2 = jax.random.normal(keys[6], (D, D), dtype=jnp.float32) * 0.1
    bg2 = jax.random.normal(keys[7], (D,),   dtype=jnp.float32) * 0.1
    wt2 = jax.random.normal(keys[8], (D, D), dtype=jnp.float32) * 0.1
    bt2 = jax.random.normal(keys[9], (D,),   dtype=jnp.float32) * 0.1

    x_ids = jax.random.randint(keys[10], (B, L), 0, V, dtype=jnp.int32)

    out = bidaf_embedding(x_ids, word_vectors, w_proj,
                          wg1, bg1, wt1, bt1, wg2, bg2, wt2, bt2)
    out = jax.block_until_ready(out)

    ref = _reference(x_ids, word_vectors, w_proj,
                     wg1, bg1, wt1, bt1, wg2, bg2, wt2, bt2)
    assert out.shape == (B, L, D), out.shape
    # bf16 matmul operands with f32 accumulation -> bf16-appropriate tolerance
    assert jnp.allclose(out, ref, atol=1e-2, rtol=1e-2), "mismatch vs JAX reference"

    print("KERNEL_OK")
</pallas_src>

<mosaic_0001>
module attributes {stable_mosaic.version = 11 : i64} {
  func.func @bidaf_embed_kernel(%arg0: i32, %arg1: memref<8x64xbf16, #tpu.memory_space<vmem>>, %arg2: memref<64x32xbf16, #tpu.memory_space<vmem>>, %arg3: memref<32x64xbf16, #tpu.memory_space<vmem>>, %arg4: memref<1x64xf32, #tpu.memory_space<vmem>>, %arg5: memref<32x64xbf16, #tpu.memory_space<vmem>>, %arg6: memref<1x64xf32, #tpu.memory_space<vmem>>, %arg7: memref<8x32xf32, #tpu.memory_space<vmem>>) attributes {dimension_semantics = [#tpu.dimension_semantics<parallel>], iteration_bounds = array<i64: 2>, scalar_prefetch = 0 : i64, scratch_operands = 0 : i64, tpu.core_type = #tpu.core_type<tc>, window_params = [{transform_indices = @transform_0, window_bounds = array<i64: 8, 64>}, {pipeline_mode = #tpu.pipeline_mode<synchronous>, transform_indices = @transform_1, window_bounds = array<i64: 64, 32>}, {pipeline_mode = #tpu.pipeline_mode<synchronous>, transform_indices = @transform_2, window_bounds = array<i64: 32, 64>}, {pipeline_mode = #tpu.pipeline_mode<synchronous>, transform_indices = @transform_3, window_bounds = array<i64: 1, 64>}, {pipeline_mode = #tpu.pipeline_mode<synchronous>, transform_indices = @transform_4, window_bounds = array<i64: 32, 64>}, {pipeline_mode = #tpu.pipeline_mode<synchronous>, transform_indices = @transform_5, window_bounds = array<i64: 1, 64>}, {transform_indices = @transform_6, window_bounds = array<i64: 8, 32>}]} {
    %c0 = arith.constant 0 : index
    %c0_0 = arith.constant 0 : index
    %0 = vector.load %arg1[%c0, %c0_0] : memref<8x64xbf16, #tpu.memory_space<vmem>>, vector<8x64xbf16>
    %c0_1 = arith.constant 0 : index
    %c0_2 = arith.constant 0 : index
    %1 = vector.load %arg2[%c0_1, %c0_2] : memref<64x32xbf16, #tpu.memory_space<vmem>>, vector<64x32xbf16>
    %cst = arith.constant dense<0.000000e+00> : vector<8x32xf32>
    %2 = tpu.matmul %0, %1, %cst {dimension_numbers = #tpu.dot_dimension_numbers<[1], [0], [0], [1], [0, 0, 1, 1], [], []>} : vector<8x64xbf16>, vector<64x32xbf16>, vector<8x32xf32> -> vector<8x32xf32>
    %3 = arith.truncf %2 : vector<8x32xf32> to vector<8x32xbf16>
    %c0_3 = arith.constant 0 : index
    %c0_4 = arith.constant 0 : index
    %4 = vector.load %arg3[%c0_3, %c0_4] : memref<32x64xbf16, #tpu.memory_space<vmem>>, vector<32x64xbf16>
    %cst_5 = arith.constant dense<0.000000e+00> : vector<8x64xf32>
    %5 = tpu.matmul %3, %4, %cst_5 {dimension_numbers = #tpu.dot_dimension_numbers<[1], [0], [0], [1], [0, 0, 1, 1], [], []>} : vector<8x32xbf16>, vector<32x64xbf16>, vector<8x64xf32> -> vector<8x64xf32>
    %c0_6 = arith.constant 0 : index
    %c0_7 = arith.constant 0 : index
    %6 = vector.load %arg4[%c0_6, %c0_7] : memref<1x64xf32, #tpu.memory_space<vmem>>, vector<1x64xf32>
    %7 = vector.broadcast %6 : vector<1x64xf32> to vector<8x64xf32>
    %8 = arith.addf %5, %7 : vector<8x64xf32>
    %9 = vector.extract_strided_slice %8 {offsets = [0, 0], sizes = [8, 32], strides = [1, 1]} : vector<8x64xf32> to vector<8x32xf32>
    %10 = arith.negf %9 : vector<8x32xf32>
    %11 = math.exp %10 : vector<8x32xf32>
    %cst_8 = arith.constant 1.000000e+00 : f32
    %12 = vector.broadcast %cst_8 : f32 to vector<8x32xf32>
    %13 = arith.addf %12, %11 : vector<8x32xf32>
    %14 = arith.divf %12, %13 : vector<8x32xf32>
    %15 = vector.extract_strided_slice %8 {offsets = [0, 32], sizes = [8, 32], strides = [1, 1]} : vector<8x64xf32> to vector<8x32xf32>
    %cst_9 = arith.constant 0.000000e+00 : f32
    %16 = vector.broadcast %cst_9 : f32 to vector<8x32xf32>
    %17 = arith.maximumf %15, %16 : vector<8x32xf32>
    %18 = arith.subf %17, %2 : vector<8x32xf32>
    %19 = arith.mulf %14, %18 : vector<8x32xf32>
    %20 = arith.addf %2, %19 : vector<8x32xf32>
    %21 = arith.truncf %20 : vector<8x32xf32> to vector<8x32xbf16>
    %c0_10 = arith.constant 0 : index
    %c0_11 = arith.constant 0 : index
    %22 = vector.load %arg5[%c0_10, %c0_11] : memref<32x64xbf16, #tpu.memory_space<vmem>>, vector<32x64xbf16>
    %cst_12 = arith.constant dense<0.000000e+00> : vector<8x64xf32>
    %23 = tpu.matmul %21, %22, %cst_12 {dimension_numbers = #tpu.dot_dimension_numbers<[1], [0], [0], [1], [0, 0, 1, 1], [], []>} : vector<8x32xbf16>, vector<32x64xbf16>, vector<8x64xf32> -> vector<8x64xf32>
    %c0_13 = arith.constant 0 : index
    %c0_14 = arith.constant 0 : index
    %24 = vector.load %arg6[%c0_13, %c0_14] : memref<1x64xf32, #tpu.memory_space<vmem>>, vector<1x64xf32>
    %25 = vector.broadcast %24 : vector<1x64xf32> to vector<8x64xf32>
    %26 = arith.addf %23, %25 : vector<8x64xf32>
    %27 = vector.extract_strided_slice %26 {offsets = [0, 0], sizes = [8, 32], strides = [1, 1]} : vector<8x64xf32> to vector<8x32xf32>
    %28 = arith.negf %27 : vector<8x32xf32>
    %29 = math.exp %28 : vector<8x32xf32>
    %cst_15 = arith.constant 1.000000e+00 : f32
    %30 = vector.broadcast %cst_15 : f32 to vector<8x32xf32>
    %31 = arith.addf %30, %29 : vector<8x32xf32>
    %32 = arith.divf %30, %31 : vector<8x32xf32>
    %33 = vector.extract_strided_slice %26 {offsets = [0, 32], sizes = [8, 32], strides = [1, 1]} : vector<8x64xf32> to vector<8x32xf32>
    %cst_16 = arith.constant 0.000000e+00 : f32
    %34 = vector.broadcast %cst_16 : f32 to vector<8x32xf32>
    %35 = arith.maximumf %33, %34 : vector<8x32xf32>
    %36 = arith.subf %35, %20 : vector<8x32xf32>
    %37 = arith.mulf %32, %36 : vector<8x32xf32>
    %38 = arith.addf %20, %37 : vector<8x32xf32>
    %c0_17 = arith.constant 0 : index
    %c0_18 = arith.constant 0 : index
    %39 = vector.load %arg7[%c0_17, %c0_18] : memref<8x32xf32, #tpu.memory_space<vmem>>, vector<8x32xf32>
    tpu.vector_store %arg7[%c0_17, %c0_18], %38 {strides = array<i32>} : memref<8x32xf32, #tpu.memory_space<vmem>>, vector<8x32xf32>,
    return
  }
  func.func @transform_0(%arg0: i32) -> (i32, i32) {
    %c0_i32 = arith.constant 0 : i32
    %c0_i32_0 = arith.constant 0 : i32
    return %arg0, %c0_i32 : i32, i32
  }
  func.func @transform_1(%arg0: i32) -> (i32, i32) {
    %c0_i32 = arith.constant 0 : i32
    %c0_i32_0 = arith.constant 0 : i32
    %c0_i32_1 = arith.constant 0 : i32
    return %c0_i32, %c0_i32_0 : i32, i32
  }
  func.func @transform_2(%arg0: i32) -> (i32, i32) {
    %c0_i32 = arith.constant 0 : i32
    %c0_i32_0 = arith.constant 0 : i32
    %c0_i32_1 = arith.constant 0 : i32
    return %c0_i32, %c0_i32_0 : i32, i32
  }
  func.func @transform_3(%arg0: i32) -> (i32, i32) {
    %c0_i32 = arith.constant 0 : i32
    %c0_i32_0 = arith.constant 0 : i32
    %c0_i32_1 = arith.constant 0 : i32
    return %c0_i32, %c0_i32_0 : i32, i32
  }
  func.func @transform_4(%arg0: i32) -> (i32, i32) {
    %c0_i32 = arith.constant 0 : i32
    %c0_i32_0 = arith.constant 0 : i32
    %c0_i32_1 = arith.constant 0 : i32
    return %c0_i32, %c0_i32_0 : i32, i32
  }
  func.func @transform_5(%arg0: i32) -> (i32, i32) {
    %c0_i32 = arith.constant 0 : i32
    %c0_i32_0 = arith.constant 0 : i32
    %c0_i32_1 = arith.constant 0 : i32
    return %c0_i32, %c0_i32_0 : i32, i32
  }
  func.func @transform_6(%arg0: i32) -> (i32, i32) {
    %c0_i32 = arith.constant 0 : i32
    %c0_i32_0 = arith.constant 0 : i32
    return %arg0, %c0_i32 : i32, i32
  }
}

</mosaic_0001>

<llo_original>
// kernel: tpu_custom_call.1
$region0: #{tpu_custom_call.1}
  #allocation0 [shape = 'u32[]', space=smem, size = 0x4, offset = 0x4, fixed_abs, tag = 'smem constant byte address 0x4 - core index']
  #allocation1 [shape = 'u32[144,128]{1,0:T(1,128)}', space=vmem, size = 0x12000, scoped, tag = 'internal scratch']
  %s0 = inlined_call_operand.vmem [shape: bf16[16,64], index: 0, kind: input, shape index: {}]
  %s1 = inlined_call_operand.vmem [shape: bf16[64,32], index: 1, kind: input, shape index: {}]
  %s2 = inlined_call_operand.vmem [shape: bf16[32,64], index: 2, kind: input, shape index: {}]
  %s3 = inlined_call_operand.vmem [shape: f32[1,64], index: 3, kind: input, shape index: {}]
  %s4 = inlined_call_operand.vmem [shape: bf16[32,64], index: 4, kind: input, shape index: {}]
  %s5 = inlined_call_operand.vmem [shape: f32[1,64], index: 5, kind: input, shape index: {}]
  %s6 = inlined_call_operand.hbm [shape: f32[16,32], index: 6, kind: output, shape index: {}]
  %s7 = sld [smem:[#allocation0]]
  $region57: #{tpu_custom_call.1} parent=0
    _
  %s9 = ssub.s32 1, %s7
  %s10 = scalar_select 0, %s9, %s7
  $region1: #{tpu_custom_call.1} parent=0
    #allocation2 [shape = 'u8[8192]{0}', space=vmem, size = 0x2000, scoped, tag = 'output window, operand 0']
    #allocation3 [shape = 's32[2]{0}', space=sflag, size = 0x8, scoped, tag = 'scoped memory for tpu_custom_call.1']
    %11 = vsyncpa [#allocation3], 0
    %s12 = scalar_lea.sflag [#allocation3], 1
    %13 = vsyncpa %s12, 0
    loop: start=0, step=1, limit=4
    $region2: #{tpu_custom_call.1} parent=1 // loop_pre_header
      _
    $region3: #{tpu_custom_call.1} parent=1 // loop_header
      %s15 = sphi 0, %s19
      %p16 = scmp.ge.s32.totalorder %s15, 4
      %s25 = sphi 0, %s27
      %s28 = sphi 0, %s25
      %s29 = sphi 0, %s28
      %s45 = sphi 0, %s29
      %s49 = sphi 0, %s49
      %s51 = sphi 0, %s49
      %s52 = sphi 0, %s51
      %s66 = sphi 0, %s52
      %s70 = sphi 0, %s70
      %s72 = sphi 0, %s70
      %s73 = sphi 0, %s72
      %s87 = sphi 0, %s73
      %s91 = sphi 0, %s91
      %s93 = sphi 0, %s91
      %s94 = sphi 0, %s93
      %s108 = sphi 0, %s94
      %s112 = sphi 0, %s112
      %s114 = sphi 0, %s112
      %s115 = sphi 0, %s114
      %s129 = sphi 0, %s115
      %s133 = sphi 0, %s133
      %s135 = sphi 0, %s133
      %s136 = sphi 0, %s135
      %s150 = sphi 0, %s136
      %s156 = sphi 0, %s158
      %s159 = sphi 0, %s156
      %s160 = sphi 0, %s159
      %s176 = sphi 0, %s160
    $region4: #{tpu_custom_call.1} parent=1 // loop_header_branch
      %18 = sbr.rel (%p16) target = $region8
    $region5: #{tpu_custom_call.1} parent=1 // loop_body
      %s20 = ssub.s32 %s15, 1
      %s21 = ssub.s32 %s15, 2
      %s22 = sadd.s32 %s15, 1
      %s23 = ssub.s32 %s15, %s22
      %p24 = scmp.eq.s32.totalorder %s23, 0
      %s26 = sadd.s32 %s25, 1
      %s27 = scalar_select %p24, %s25, %s26
      %p30 = pneg %p24
      %p31 = scmp.eq.s32.totalorder %s15, 1
      %p32 = por %p30, %p31
      %p33 = scmp.ne.s32.totalorder %s25, %s28
      %p34 = scmp.eq.s32.totalorder %s15, 0
      %p35 = por %p33, %p34
      %p36 = scmp.ne.s32.totalorder %s25, %s28
      %p37 = scmp.eq.s32.totalorder %s20, 1
      %p38 = por %p36, %p37
      %p39 = scmp.ne.s32.totalorder %s28, %s29
      %p40 = scmp.eq.s32.totalorder %s20, 0
      %p41 = por %p39, %p40
      %p42 = scmp.ne.s32.totalorder %s28, %s29
      %p43 = scmp.eq.s32.totalorder %s21, 1
      %p44 = por %p42, %p43
      %p46 = scmp.ne.s32.totalorder %s29, %s45
      %p47 = scmp.eq.s32.totalorder %s21, 0
      %p48 = por %p46, %p47
      %s50 = sadd.s32 %s49, 1
      %p53 = scmp.eq.s32.totalorder %s15, 1
      %p54 = scmp.ne.s32.totalorder %s49, %s51
      %p55 = scmp.eq.s32.totalorder %s15, 0
      %p56 = por %p54, %p55
      %p57 = scmp.ne.s32.totalorder %s49, %s51
      %p58 = scmp.eq.s32.totalorder %s20, 1
      %p59 = por %p57, %p58
      %p60 = scmp.ne.s32.totalorder %s51, %s52
      %p61 = scmp.eq.s32.totalorder %s20, 0
      %p62 = por %p60, %p61
      %p63 = scmp.ne.s32.totalorder %s51, %s52
      %p64 = scmp.eq.s32.totalorder %s21, 1
      %p65 = por %p63, %p64
      %p67 = scmp.ne.s32.totalorder %s52, %s66
      %p68 = scmp.eq.s32.totalorder %s21, 0
      %p69 = por %p67, %p68
      %s71 = sadd.s32 %s70, 1
      %p74 = scmp.eq.s32.totalorder %s15, 1
      %p75 = scmp.ne.s32.totalorder %s70, %s72
      %p76 = scmp.eq.s32.totalorder %s15, 0
      %p77 = por %p75, %p76
      %p78 = scmp.ne.s32.totalorder %s70, %s72
      %p79 = scmp.eq.s32.totalorder %s20, 1
      %p80 = por %p78, %p79
      %p81 = scmp.ne.s32.totalorder %s72, %s73
      %p82 = scmp.eq.s32.totalorder %s20, 0
      %p83 = por %p81, %p82
      %p84 = scmp.ne.s32.totalorder %s72, %s73
      %p85 = scmp.eq.s32.totalorder %s21, 1
      %p86 = por %p84, %p85
      %p88 = scmp.ne.s32.totalorder %s73, %s87
      %p89 = scmp.eq.s32.totalorder %s21, 0
      %p90 = por %p88, %p89
      %s92 = sadd.s32 %s91, 1
      %p95 = scmp.eq.s32.totalorder %s15, 1
      %p96 = scmp.ne.s32.totalorder %s91, %s93
      %p97 = scmp.eq.s32.totalorder %s15, 0
      %p98 = por %p96, %p97
      %p99 = scmp.ne.s32.totalorder %s91, %s93
      %p100 = scmp.eq.s32.totalorder %s20, 1
      %p101 = por %p99, %p100
      %p102 = scmp.ne.s32.totalorder %s93, %s94
      %p103 = scmp.eq.s32.totalorder %s20, 0
      %p104 = por %p102, %p103
      %p105 = scmp.ne.s32.totalorder %s93, %s94
      %p106 = scmp.eq.s32.totalorder %s21, 1
      %p107 = por %p105, %p106
      %p109 = scmp.ne.s32.totalorder %s94, %s108
      %p110 = scmp.eq.s32.totalorder %s21, 0
      %p111 = por %p109, %p110
      %s113 = sadd.s32 %s112, 1
      %p116 = scmp.eq.s32.totalorder %s15, 1
      %p117 = scmp.ne.s32.totalorder %s112, %s114
      %p118 = scmp.eq.s32.totalorder %s15, 0
      %p119 = por %p117, %p118
      %p120 = scmp.ne.s32.totalorder %s112, %s114
      %p121 = scmp.eq.s32.totalorder %s20, 1
      %p122 = por %p120, %p121
      %p123 = scmp.ne.s32.totalorder %s114, %s115
      %p124 = scmp.eq.s32.totalorder %s20, 0
      %p125 = por %p123, %p124
      %p126 = scmp.ne.s32.totalorder %s114, %s115
      %p127 = scmp.eq.s32.totalorder %s21, 1
      %p128 = por %p126, %p127
      %p130 = scmp.ne.s32.totalorder %s115, %s129
      %p131 = scmp.eq.s32.totalorder %s21, 0
      %p132 = por %p130, %p131
      %s134 = sadd.s32 %s133, 1
      %p137 = scmp.eq.s32.totalorder %s15, 1
      %p138 = scmp.ne.s32.totalorder %s133, %s135
      %p139 = scmp.eq.s32.totalorder %s15, 0
      %p140 = por %p138, %p139
      %p141 = scmp.ne.s32.totalorder %s133, %s135
      %p142 = scmp.eq.s32.totalorder %s20, 1
      %p143 = por %p141, %p142
      %p144 = scmp.ne.s32.totalorder %s135, %s136
      %p145 = scmp.eq.s32.totalorder %s20, 0
      %p146 = por %p144, %p145
      %p147 = scmp.ne.s32.totalorder %s135, %s136
      %p148 = scmp.eq.s32.totalorder %s21, 1
      %p149 = por %p147, %p148
      %p151 = scmp.ne.s32.totalorder %s136, %s150
      %p152 = scmp.eq.s32.totalorder %s21, 0
      %p153 = por %p151, %p152
      %s154 = ssub.s32 %s15, %s22
      %p155 = scmp.eq.s32.totalorder %s154, 0
      %s157 = sadd.s32 %s156, 1
      %s158 = scalar_select %p155, %s156, %s157
      %p161 = pneg %p155
      %p162 = scmp.eq.s32.totalorder %s15, 1
      %p163 = por %p161, %p162
      %p164 = scmp.ne.s32.totalorder %s156, %s159
      %p165 = scmp.eq.s32.totalorder %s15, 0
      %p166 = por %p164, %p165
      %p167 = scmp.ne.s32.totalorder %s156, %s159
      %p168 = scmp.eq.s32.totalorder %s20, 1
      %p169 = por %p167, %p168
      %p170 = scmp.ne.s32.totalorder %s159, %s160
      %p171 = scmp.eq.s32.totalorder %s20, 0
      %p172 = por %p170, %p171
      %p173 = scmp.ne.s32.totalorder %s159, %s160
      %p174 = scmp.eq.s32.totalorder %s21, 1
      %p175 = por %p173, %p174
      %p177 = scmp.ne.s32.totalorder %s160, %s176
      %p178 = scmp.eq.s32.totalorder %s21, 0
      %p179 = por %p177, %p178
      %p180 = scmp.le.s32.totalorder 1, %s15
      %p181 = scmp.lt.s32.totalorder %s15, 3
      %p182 = pnand %p180, %p181
      %p183 = pneg %p182
      // Predicated region
      $region9: #{tpu_custom_call.1} parent=5 // pred_check
        _
      $region10: #{tpu_custom_call.1} parent=5 // pred_check_branch
        %185 = sbr.rel (%p182) target = $region12
      $region11: #{tpu_custom_call.1} parent=5 // pred_region
        %s186 = ssub.s32 %s15, 1
        // Predicated region
        $region13: #{tpu_custom_call.1} parent=11 // pred_check
          %p187 = pneg %p62
        $region14: #{tpu_custom_call.1} parent=11 // pred_check_branch
          %189 = sbr.rel (%p187) target = $region16
        $region15: #{tpu_custom_call.1} parent=11 // pred_region
          _
        $region16: #{tpu_custom_call.1} parent=11 // pred_fallthru
          _
        // Predicated region
        $region17: #{tpu_custom_call.1} parent=11 // pred_check
          %p190 = pneg %p83
        $region18: #{tpu_custom_call.1} parent=11 // pred_check_branch
          %192 = sbr.rel (%p190) target = $region20
        $region19: #{tpu_custom_call.1} parent=11 // pred_region
          _
        $region20: #{tpu_custom_call.1} parent=11 // pred_fallthru
          _
        // Predicated region
        $region21: #{tpu_custom_call.1} parent=11 // pred_check
          %p193 = pneg %p104
        $region22: #{tpu_custom_call.1} parent=11 // pred_check_branch
          %195 = sbr.rel (%p193) target = $region24
        $region23: #{tpu_custom_call.1} parent=11 // pred_region
          _
        $region24: #{tpu_custom_call.1} parent=11 // pred_fallthru
          _
        // Predicated region
        $region25: #{tpu_custom_call.1} parent=11 // pred_check
          %p196 = pneg %p125
        $region26: #{tpu_custom_call.1} parent=11 // pred_check_branch
          %198 = sbr.rel (%p196) target = $region28
        $region27: #{tpu_custom_call.1} parent=11 // pred_region
          _
        $region28: #{tpu_custom_call.1} parent=11 // pred_fallthru
          _
        // Predicated region
        $region29: #{tpu_custom_call.1} parent=11 // pred_check
          %p199 = pneg %p146
        $region30: #{tpu_custom_call.1} parent=11 // pred_check_branch
          %201 = sbr.rel (%p199) target = $region32
        $region31: #{tpu_custom_call.1} parent=11 // pred_region
          _
        $region32: #{tpu_custom_call.1} parent=11 // pred_fallthru
          _
      $region12: #{tpu_custom_call.1} parent=5 // pred_fallthru
        _
      %p202 = scmp.lt.s32.totalorder %s15, 2
      // Predicated region
      $region33: #{tpu_custom_call.1} parent=5 // pred_check
        %p203 = pneg %p202
      $region34: #{tpu_custom_call.1} parent=5 // pred_check_branch
        %205 = sbr.rel (%p203) target = $region36
      $region35: #{tpu_custom_call.1} parent=5 // pred_region
        // Predicated region
        $region37: #{tpu_custom_call.1} parent=35 // pred_check
          %p206 = pneg %p35
        $region38: #{tpu_custom_call.1} parent=35 // pred_check_branch
          %208 = sbr.rel (%p206) target = $region40
        $region39: #{tpu_custom_call.1} parent=35 // pred_region
          %p209 = scmp.lt.s32.totalorder %s15, 1
          %s210 = scalar_select %p209, %s15, 1
          %s211 = smul.addr %s210, 4
          %s212 = scalar_lea.vmem %s0, %s211
        $region40: #{tpu_custom_call.1} parent=35 // pred_fallthru
          _
      $region36: #{tpu_custom_call.1} parent=5 // pred_fallthru
        _
      %p213 = scmp.le.s32.totalorder 1, %s15
      %p214 = scmp.lt.s32.totalorder %s15, 3
      %p215 = pnand %p213, %p214
      %p216 = pneg %p215
      // Predicated region
      $region41: #{tpu_custom_call.1} parent=5 // pred_check
        _
      $region42: #{tpu_custom_call.1} parent=5 // pred_check_branch
        %218 = sbr.rel (%p215) target = $region44
      $region43: #{tpu_custom_call.1} parent=5 // pred_region
        %s219 = ssub.s32 %s15, 1
        %p220 = scmp.lt.s32.totalorder %s20, 1
        %s221 = scalar_select %p220, %s20, 1
        %s222 = smul.addr %s221, 4
        %s223 = scalar_lea.vmem %s0, %s222
        %p224 = pneg %p41
        %p225 = pneg %p38
        %p226 = pneg %p62
        %p227 = pneg %p59
        %p228 = pneg %p83
        %p229 = pneg %p80
        %p230 = pneg %p104
        %p231 = pneg %p101
        %p232 = pneg %p125
        %p233 = pneg %p122
        %p234 = pneg %p146
        %p235 = pneg %p143
        %p236 = pneg %p172
        %p237 = pneg %p169
        %s238 = sand.u32 %s159, 1
        %s239 = scalar_lea.sflag [#allocation3], %s238
        %s240 = sand.u32 %s159, 1
        %s241 = smul.addr %s240, 8
        %s242 = scalar_lea.vmem [#allocation2], %s241
        %p243 = scmp.lt.s32.totalorder %s20, 1
        %s244 = scalar_select %p243, %s20, 1
        %s245 = smul.addr %s244, 4
        %s246 = scalar_lea.vmem %s0, %s245
        %v248 = vld [vmem:[%s246] sm:$0xf]
        %v249 = vld [vmem:[%s1] sm:$0xf]
        %v250 = vld [vmem:[%s1 + $0x4] sm:$0xf]
        %v251 = vld [vmem:[%s1 + $0x8] sm:$0xf]
        %v252 = vld [vmem:[%s1 + $0xc] sm:$0xf]
        %v253 = vld [vmem:[%s1 + $0x10] sm:$0xf]
        %v254 = vld [vmem:[%s1 + $0x14] sm:$0xf]
        %v255 = vld [vmem:[%s1 + $0x18] sm:$0xf]
        %v256 = vld [vmem:[%s1 + $0x1c] sm:$0xf]
        %v265 = vunpack.c.l.b16 %v249
        %v266 = vunpack.c.l.b16 %v250
        %v267 = vunpack.c.l.b16 %v251
        %v268 = vunpack.c.l.b16 %v252
        %v269 = vunpack.c.l.b16 %v253
        %v270 = vunpack.c.l.b16 %v254
        %v271 = vunpack.c.l.b16 %v255
        %v272 = vunpack.c.l.b16 %v256
        %v273 = vpack.c.b16 %v266, %v265
        %v274 = vpack.c.b16 %v268, %v267
        %v275 = vpack.c.b16 %v270, %v269
        %v276 = vpack.c.b16 %v272, %v271
        %vm281 = vcmask 523264
        %v283 = vsel %vm281, %v248, 0
        %285 = vmatprep.subr.bf16.mxu0 0
        %286 = vmatpush1.bf16.msra.mxu0 %v273
        %287 = vmatprep.subr.bf16.mxu0 0
        %288 = vmatpush1.bf16.msra.mxu0 %v274
        %289 = vmatprep.subr.bf16.mxu0 0
        %290 = vmatpush1.bf16.msra.mxu0 %v275
        %291 = vmatprep.subr.bf16.mxu0 0
        %292 = vmatpush1.bf16.msra.mxu0 %v276
        %293 = vmatprep.subr.bf16.mxu0 0
        %294 = vmatpush1.bf16.msra.mxu0 0
        %295 = vmatprep.subr.bf16.mxu0 0
        %296 = vmatpush1.bf16.msra.mxu0 0
        %297 = vmatprep.subr.bf16.mxu0 0
        %298 = vmatpush1.bf16.msra.mxu0 0
        %299 = vmatprep.subr.bf16.mxu0 0
        %300 = vmatpush1.bf16.msra.mxu0 0
        %301 = vmatprep.subr.bf16.mxu0 0
        %302 = vmatpush1.bf16.msra.mxu0 0
        %303 = vmatprep.subr.bf16.mxu0 0
        %304 = vmatpush1.bf16.msra.mxu0 0
        %305 = vmatprep.subr.bf16.mxu0 0
        %306 = vmatpush1.bf16.msra.mxu0 0
        %307 = vmatprep.subr.bf16.mxu0 0
        %308 = vmatpush1.bf16.msra.mxu0 0
        %309 = vmatprep.subr.bf16.mxu0 0
        %310 = vmatpush1.bf16.msra.mxu0 0
        %311 = vmatprep.subr.bf16.mxu0 0
        %312 = vmatpush1.bf16.msra.mxu0 0
        %313 = vmatprep.subr.bf16.mxu0 0
        %314 = vmatpush1.bf16.msra.mxu0 0
        %315 = vmatprep.subr.bf16.mxu0 0
        %316 = vmatpush1.bf16.msra.mxu0 0
        %317 = vmatprep.mubr.bf16.mxu0 0
        %318 = vmatmul.mubr.bf16.gmra.mrb[0].mxu0 %v283
        %v319 = vpop.f32.mrb[0].mxu0
        %v320 = vadd.f32 0.0, %v319
        %v321 = vpop.f32.mrb[0].mxu0
        %v322 = vpop.f32.mrb[0].mxu0
        %v323 = vpop.f32.mrb[0].mxu0
        %324 = vdwg.mxu0
        %v325 = vpack.c.bf16 %v320, %v320
        %v326 = vld [vmem:[%s2] sm:$0xf]
        %v327 = vld [vmem:[%s2 + $0x4] sm:$0xf]
        %v328 = vld [vmem:[%s2 + $0x8] sm:$0xf]
        %v329 = vld [vmem:[%s2 + $0xc] sm:$0xf]
        %v330 = vld [vmem:[%s3] sm:$0x1]
        %v332 = vlaneseq
        %v333 = vshrl.u32 %v332, 7
        %v334 = vsub.s32 0, %v333
        %v335 = vrot.slane %v330, %v334
        %v341 = vunpack.c.l.b16 %v326
        %v342 = vunpack.c.l.b16 %v327
        %v343 = vunpack.c.l.b16 %v328
        %v344 = vunpack.c.l.b16 %v329
        %v345 = vpack.c.b16 %v342, %v341
        %v346 = vpack.c.b16 %v344, %v343
        %vm349 = vcmask 261120
        %v351 = vsel %vm349, %v325, 0
        %353 = vmatprep.subr.bf16.mxu0 0
        %354 = vmatpush1.bf16.msra.mxu0 %v345
        %355 = vmatprep.subr.bf16.mxu0 0
        %356 = vmatpush1.bf16.msra.mxu0 %v346
        %357 = vmatprep.subr.bf16.mxu0 0
        %358 = vmatpush1.bf16.msra.mxu0 0
        %359 = vmatprep.subr.bf16.mxu0 0
        %360 = vmatpush1.bf16.msra.mxu0 0
        %361 = vmatprep.subr.bf16.mxu0 0
        %362 = vmatpush1.bf16.msra.mxu0 0
        %363 = vmatprep.subr.bf16.mxu0 0
        %364 = vmatpush1.bf16.msra.mxu0 0
        %365 = vmatprep.subr.bf16.mxu0 0
        %366 = vmatpush1.bf16.msra.mxu0 0
        %367 = vmatprep.subr.bf16.mxu0 0
        %368 = vmatpush1.bf16.msra.mxu0 0
        %369 = vmatprep.subr.bf16.mxu0 0
        %370 = vmatpush1.bf16.msra.mxu0 0
        %371 = vmatprep.subr.bf16.mxu0 0
        %372 = vmatpush1.bf16.msra.mxu0 0
        %373 = vmatprep.subr.bf16.mxu0 0
        %374 = vmatpush1.bf16.msra.mxu0 0
        %375 = vmatprep.subr.bf16.mxu0 0
        %376 = vmatpush1.bf16.msra.mxu0 0
        %377 = vmatprep.subr.bf16.mxu0 0
        %378 = vmatpush1.bf16.msra.mxu0 0
        %379 = vmatprep.subr.bf16.mxu0 0
        %380 = vmatpush1.bf16.msra.mxu0 0
        %381 = vmatprep.subr.bf16.mxu0 0
        %382 = vmatpush1.bf16.msra.mxu0 0
        %383 = vmatprep.subr.bf16.mxu0 0
        %384 = vmatpush1.bf16.msra.mxu0 0
        %385 = vmatprep.mubr.bf16.mxu0 0
        %386 = vmatmul.mubr.bf16.gmra.mrb[0].mxu0 %v351
        %v387 = vpop.f32.mrb[0].mxu0
        %v388 = vadd.f32 %v335, %v387
        %v389 = vpop.f32.mrb[0].mxu0
        %v390 = vpop.f32.mrb[0].mxu0
        %v391 = vpop.f32.mrb[0].mxu0
        %392 = vdwg.mxu0
        %v393 = vxor.u32 %v388, 2147483648
        %v394 = vmul.f32 %v393, 1.442695
        %v395 = vpow.pop %v394
        %v396 = vadd.f32 %v395, 1.0
        %v397 = vrcp.pop %v396
        %v398 = vmul.f32 1.0, %v397
        %v399 = vmax.f32 %v388, 0.0
        %401 = vrot.lane.b32.xlu0 %v320, 32
        %v402 = vpop.permute.xlu0 %401
        %v404 = vsub.f32 %v399, %v402
        %406 = vrot.lane.b32.xlu0 %v404, 96
        %v407 = vpop.permute.xlu0 %406
        %v409 = vmul.f32 %v398, %v407
        %v410 = vadd.f32 %v320, %v409
        %v411 = vpack.c.bf16 %v410, %v410
        %v412 = vld [vmem:[%s4] sm:$0xf]
        %v413 = vld [vmem:[%s4 + $0x4] sm:$0xf]
        %v414 = vld [vmem:[%s4 + $0x8] sm:$0xf]
        %v415 = vld [vmem:[%s4 + $0xc] sm:$0xf]
        %v416 = vld [vmem:[%s5] sm:$0x1]
        %v418 = vlaneseq
        %v419 = vshrl.u32 %v418, 7
        %v420 = vsub.s32 0, %v419
        %v421 = vrot.slane %v416, %v420
        %v427 = vunpack.c.l.b16 %v412
        %v428 = vunpack.c.l.b16 %v413
        %v429 = vunpack.c.l.b16 %v414
        %v430 = vunpack.c.l.b16 %v415
        %v431 = vpack.c.b16 %v428, %v427
        %v432 = vpack.c.b16 %v430, %v429
        %v436 = vsel %vm349, %v411, 0
        %438 = vmatprep.subr.bf16.mxu0 0
        %439 = vmatpush1.bf16.msra.mxu0 %v431
        %440 = vmatprep.subr.bf16.mxu0 0
        %441 = vmatpush1.bf16.msra.mxu0 %v432
        %442 = vmatprep.subr.bf16.mxu0 0
        %443 = vmatpush1.bf16.msra.mxu0 0
        %444 = vmatprep.subr.bf16.mxu0 0
        %445 = vmatpush1.bf16.msra.mxu0 0
        %446 = vmatprep.subr.bf16.mxu0 0
        %447 = vmatpush1.bf16.msra.mxu0 0
        %448 = vmatprep.subr.bf16.mxu0 0
        %449 = vmatpush1.bf16.msra.mxu0 0
        %450 = vmatprep.subr.bf16.mxu0 0
        %451 = vmatpush1.bf16.msra.mxu0 0
        %452 = vmatprep.subr.bf16.mxu0 0
        %453 = vmatpush1.bf16.msra.mxu0 0
        %454 = vmatprep.subr.bf16.mxu0 0
        %455 = vmatpush1.bf16.msra.mxu0 0
        %456 = vmatprep.subr.bf16.mxu0 0
        %457 = vmatpush1.bf16.msra.mxu0 0
        %458 = vmatprep.subr.bf16.mxu0 0
        %459 = vmatpush1.bf16.msra.mxu0 0
        %460 = vmatprep.subr.bf16.mxu0 0
        %461 = vmatpush1.bf16.msra.mxu0 0
        %462 = vmatprep.subr.bf16.mxu0 0
        %463 = vmatpush1.bf16.msra.mxu0 0
        %464 = vmatprep.subr.bf16.mxu0 0
        %465 = vmatpush1.bf16.msra.mxu0 0
        %466 = vmatprep.subr.bf16.mxu0 0
        %467 = vmatpush1.bf16.msra.mxu0 0
        %468 = vmatprep.subr.bf16.mxu0 0
        %469 = vmatpush1.bf16.msra.mxu0 0
        %470 = vmatprep.mubr.bf16.mxu0 0
        %471 = vmatmul.mubr.bf16.gmra.mrb[0].mxu0 %v436
        %v472 = vpop.f32.mrb[0].mxu0
        %v473 = vadd.f32 %v421, %v472
        %v474 = vpop.f32.mrb[0].mxu0
        %v475 = vpop.f32.mrb[0].mxu0
        %v476 = vpop.f32.mrb[0].mxu0
        %477 = vdwg.mxu0
        %v478 = vxor.u32 %v473, 2147483648
        %v479 = vmul.f32 %v478, 1.442695
        %v480 = vpow.pop %v479
        %v481 = vadd.f32 %v480, 1.0
        %v482 = vrcp.pop %v481
        %v483 = vmul.f32 1.0, %v482
        %v484 = vmax.f32 %v473, 0.0
        %486 = vrot.lane.b32.xlu0 %v410, 32
        %v487 = vpop.permute.xlu0 %486
        %v489 = vsub.f32 %v484, %v487
        %491 = vrot.lane.b32.xlu0 %v489, 96
        %v492 = vpop.permute.xlu0 %491
        %v494 = vmul.f32 %v483, %v492
        %v495 = vadd.f32 %v410, %v494
        %496 = vst.msk [vmem:[%s242] sm:$0xff] %vm349, %v495
        %s497 = sand.u32 %s159, 1
        %s498 = scalar_lea.sflag [#allocation3], %s497
        %s499 = sand.u32 %s159, 1
        %s500 = smul.addr %s499, 8
        %s501 = scalar_lea.vmem [#allocation2], %s500
        // Predicated region
        $region45: #{tpu_custom_call.1} parent=43 // pred_check
          %p502 = pneg %p169
        $region46: #{tpu_custom_call.1} parent=43 // pred_check_branch
          %504 = sbr.rel (%p502) target = $region48
        $region47: #{tpu_custom_call.1} parent=43 // pred_region
          %s506 = ssub.s32 128, 128
          %507 = vsyncadd %s498, %s506
          %s508 = smul.addr %s20, 128
          %s509 = scalar_lea.hbm %s6, %s508
          %s511 = sshll.u32 %s501, 4
          %s512 = int_to_ptr.vmem [resolvable:$true] %s511
          %514 = dma.vmem_to_hbm [thread:$0]  %s512, 128, %s509, %s498
        $region48: #{tpu_custom_call.1} parent=43 // pred_fallthru
          _
      $region44: #{tpu_custom_call.1} parent=5 // pred_fallthru
        _
      %p515 = scmp.le.s32.totalorder 2, %s15
      // Predicated region
      $region49: #{tpu_custom_call.1} parent=5 // pred_check
        %p516 = pneg %p515
      $region50: #{tpu_custom_call.1} parent=5 // pred_check_branch
        %518 = sbr.rel (%p516) target = $region52
      $region51: #{tpu_custom_call.1} parent=5 // pred_region
        %s519 = ssub.s32 %s15, 2
        // Predicated region
        $region53: #{tpu_custom_call.1} parent=51 // pred_check
          %p520 = pneg %p175
        $region54: #{tpu_custom_call.1} parent=51 // pred_check_branch
          %522 = sbr.rel (%p520) target = $region56
        $region55: #{tpu_custom_call.1} parent=51 // pred_region
          %s523 = sand.u32 %s160, 1
          %s524 = scalar_lea.sflag [#allocation3], %s523
          %s525 = sand.u32 %s160, 1
          %s526 = smul.addr %s525, 8
          %s527 = scalar_lea.vmem [#allocation2], %s526
          %528 = dma.done %s524, 128
        $region56: #{tpu_custom_call.1} parent=51 // pred_fallthru
          _
      $region52: #{tpu_custom_call.1} parent=5 // pred_fallthru
        _
    $region6: #{tpu_custom_call.1} parent=1 // loop_footer
      %s19 = sadd.s32 1, %s15
    $region7: #{tpu_custom_call.1} parent=1 // loop_footer_branch
      %14 = sbr.rel target = $region3
    $region8: #{tpu_custom_call.1} parent=1 // loop_exit
      _
    %529 = vsyncpa [#allocation3], 1
    %s530 = scalar_lea.sflag [#allocation3], 1
    %531 = vsyncpa %s530, 1

</llo_original>
